<compile_context>
chip_gen: v5e
topology: v5e:2x2
jax: 0.10.0
libtpu: 0.0.40
codegen_flags: <defaults>
</compile_context>

<pallas_src>
import numpy as np

import jax
import jax.numpy as jnp
from jax import lax
from jax.experimental import pallas as pl
from jax.experimental.pallas import tpu as pltpu


def _round_up(x, m):
    return ((x + m - 1) // m) * m


def _pick_tile(n, cap):
    """Largest t <= cap with t == n, or (t % 8 == 0 and n % t == 0)."""
    if n <= cap:
        return n
    for d in range(int(cap), 7, -1):
        if d % 8 == 0 and n % d == 0:
            return d
    # TODO(synk): no multiple-of-8 divisor <= cap -> full extent (see header).
    return n


def _vmem_capacity_bytes():
    try:
        return int(pltpu.get_tpu_info().vmem_capacity_bytes)
    except Exception:
        return 64 * 1024 * 1024          # conservative fallback (v7x per-core)


# --------------------------------------------------------------------------- #
# Kernel 1: y = SiLU(LayerNorm(s @ W^T + b))   (tiny; row-tiled per batch)
# --------------------------------------------------------------------------- #
def lin1_kernel(s_ref, w_ref, b_ref, g_ref, beta_ref, y_ref):
    s = s_ref[0].astype(jnp.float32)                                  # (tm, H)
    y = jnp.dot(s, w_ref[...], preferred_element_type=jnp.float32) + b_ref[...]
    # LayerNorm over last dim (eps = 1e-5, biased variance, affine).
    mean = jnp.mean(y, axis=-1, keepdims=True)
    var = jnp.mean((y - mean) ** 2, axis=-1, keepdims=True)
    y = (y - mean) * lax.rsqrt(var + 1e-5)
    y = y * g_ref[...] + beta_ref[...]
    # SiLU tail activation.
    y = y * (1.0 / (1.0 + jnp.exp(-y)))
    y_ref[0] = y.astype(y_ref.dtype)


def _lin1(s, w_t, bias, gamma, beta, vmem_limit):
    B, N, H = s.shape
    tm = _pick_tile(N, 256)
    return pl.pallas_call(
        lin1_kernel,
        out_shape=jax.ShapeDtypeStruct((B, N, H), jnp.float32),
        grid=(B, N // tm),
        in_specs=[
            pl.BlockSpec((1, tm, H), lambda b, m: (b, m, 0)),
            pl.BlockSpec((H, H), lambda b, m: (0, 0)),
            pl.BlockSpec((1, H), lambda b, m: (0, 0)),
            pl.BlockSpec((1, H), lambda b, m: (0, 0)),
            pl.BlockSpec((1, H), lambda b, m: (0, 0)),
        ],
        out_specs=pl.BlockSpec((1, tm, H), lambda b, m: (b, m, 0)),
        compiler_params=pltpu.CompilerParams(
            dimension_semantics=("parallel", "parallel"),
            vmem_limit_bytes=vmem_limit,
        ),
    )(s, w_t, bias, gamma, beta)


# --------------------------------------------------------------------------- #
# Kernel 2: out[b, i, h] = sum_j ef[b, i, j, h] * y[b, j, h]
#           ef streamed in its original layout/dtype; y per-batch resident.
# --------------------------------------------------------------------------- #
def _make_neighbor_sum_kernel(ti, tj, ci, H):
    n_chunks = ti // ci

    def kernel(y_ref, ef_ref, o_ref, acc_ref):
        j = pl.program_id(2)

        @pl.when(j == 0)
        def _():
            acc_ref[...] = jnp.zeros_like(acc_ref)

        # y slice for this j tile (y block is batch-resident: (1, N, H)).
        j_off = pl.multiple_of(j * tj, tj)
        y_blk = y_ref[0, pl.ds(j_off, tj), :].astype(jnp.float32)      # (tj, H)
        # Hoist the broadcast out of the chunk loop (broadcasts are not CSE'd).
        y_b = jnp.broadcast_to(y_blk[None, :, :], (ci, tj, H))

        if n_chunks == 1:
            ef_c = ef_ref[0].astype(jnp.float32)                       # (ti, tj, H)
            acc_ref[...] += jnp.sum(ef_c * y_b, axis=1)
        else:
            def body(c, carry):
                i_off = pl.multiple_of(c * ci, ci)
                ef_c = ef_ref[0, pl.ds(i_off, ci), :, :].astype(jnp.float32)
                acc_ref[pl.ds(i_off, ci), :] += jnp.sum(ef_c * y_b, axis=1)
                return carry
            lax.fori_loop(0, n_chunks, body, None, unroll=2)

        @pl.when(j == pl.num_programs(2) - 1)
        def _():
            o_ref[0] = acc_ref[...].astype(o_ref.dtype)

    return kernel


def dircf_conv(s, ef_mask, w_t, bias, gamma, beta):
    B, N, H = s.shape
    assert ef_mask.shape == (B, N, N, H)

    vmem_cap = _vmem_capacity_bytes()
    # ~48 MiB limit on v7x (64 MiB physical), ~96 MiB on v5e/v6e (128 MiB).
    vmem_limit = max(32 * 1024 * 1024,
                     min(3 * vmem_cap // 4, 96 * 1024 * 1024))

    # 1) Hoisted lin1 -> LayerNorm -> SiLU (computed once, fed to the stream).
    y = _lin1(s, w_t, bias, gamma, beta, vmem_limit)                   # (B,N,H) f32

    # 2) Tile sizing with padded-shape accounting (lanes -> 128, sublanes ->
    #    8/16 depending on itemsize).  ef tile budget: 8 MiB on v7x, 16 MiB on
    #    v5e/v6e, so the default 2-deep pipeline stays comfortably in VMEM.
    itemsize = np.dtype(ef_mask.dtype).itemsize
    h_pad = _round_up(H, 128)
    ef_tile_budget = (8 if vmem_cap <= 64 * 1024 * 1024 else 16) * 1024 * 1024

    ti = _pick_tile(N, 256)
    tj_cap = max(8, ef_tile_budget // max(1, ti * h_pad * itemsize))
    tj = _pick_tile(N, tj_cap)
    ci = 8 if ti % 8 == 0 else ti           # i-rows per inner chunk

    # Megacore note: B and i are "parallel" -> B*(N/ti) units of work to split
    # across the 2 TCs on v7x (no-op on single-TC v5e/v6e).
    grid = (B, N // ti, N // tj)

    ef_bytes = B * N * N * h_pad * itemsize
    y_bytes = B * N * h_pad * 4
    out_bytes = B * N * h_pad * np.dtype(s.dtype).itemsize
    cost = pl.CostEstimate(
        flops=2 * B * N * N * H,
        transcendentals=0,
        bytes_accessed=ef_bytes + y_bytes + out_bytes,
    )

    return pl.pallas_call(
        _make_neighbor_sum_kernel(ti, tj, ci, H),
        out_shape=jax.ShapeDtypeStruct((B, N, H), s.dtype),
        grid_spec=pltpu.PrefetchScalarGridSpec(
            num_scalar_prefetch=0,
            grid=grid,
            in_specs=[
                # y: per-batch resident (same block across all i, j steps).
                pl.BlockSpec((1, N, H), lambda b, i, j: (b, 0, 0)),
                # ef: original (B, i, j, H) layout, no wrapper transpose/cast.
                pl.BlockSpec((1, ti, tj, H), lambda b, i, j: (b, i, j, 0)),
            ],
            out_specs=pl.BlockSpec((1, ti, H), lambda b, i, j: (b, i, 0)),
            scratch_shapes=[pltpu.VMEM((ti, H), jnp.float32)],
        ),
        compiler_params=pltpu.CompilerParams(
            dimension_semantics=("parallel", "parallel", "arbitrary"),
            vmem_limit_bytes=vmem_limit,
        ),
        cost_estimate=cost,
    )(y, ef_mask)


def reference(s, ef_mask, w_t, bias, gamma, beta):
    y = s @ w_t + bias[0]
    mean = jnp.mean(y, axis=-1, keepdims=True)
    var = jnp.mean((y - mean) ** 2, axis=-1, keepdims=True)
    y = (y - mean) * jax.lax.rsqrt(var + 1e-5)
    y = y * gamma[0] + beta[0]
    y = y * (1.0 / (1.0 + jnp.exp(-y)))
    return jnp.sum(ef_mask * y[:, None, :, :], axis=2)


if __name__ == "__main__":
    B, N, H = 2, 8, 32

    key = jax.random.PRNGKey(0)
    k_s, k_ef, k_w, k_b = jax.random.split(key, 4)

    s = jax.random.normal(k_s, (B, N, H), dtype=jnp.float32)
    ef_mask = jax.random.uniform(k_ef, (B, N, N, H), dtype=jnp.float32)

    # Deterministic parameter init (nn.Linear-style uniform bound).
    bound = 1.0 / (H ** 0.5)
    w = jax.random.uniform(k_w, (H, H), minval=-bound, maxval=bound,
                           dtype=jnp.float32)        # PyTorch W: (out, in)
    w_t = w.T                                        # so y = x @ w_t
    bias = jax.random.uniform(k_b, (1, H), minval=-bound, maxval=bound,
                              dtype=jnp.float32)
    gamma = jnp.ones((1, H), dtype=jnp.float32)      # LayerNorm affine init
    beta = jnp.zeros((1, H), dtype=jnp.float32)

    out = dircf_conv(s, ef_mask, w_t, bias, gamma, beta)
    jax.block_until_ready(out)

    ref = reference(s, ef_mask, w_t, bias, gamma, beta)
    assert out.shape == (B, N, H)
    assert jnp.allclose(out, ref, atol=1e-4, rtol=1e-4), "mismatch vs reference"

    print("KERNEL_OK")
</pallas_src>

<mosaic_0001>
module attributes {stable_mosaic.version = 11 : i64} {
  func.func @lin1_kernel(%arg0: i32, %arg1: i32, %arg2: memref<1x8x32xf32, #tpu.memory_space<vmem>>, %arg3: memref<32x32xf32, #tpu.memory_space<vmem>>, %arg4: memref<1x32xf32, #tpu.memory_space<vmem>>, %arg5: memref<1x32xf32, #tpu.memory_space<vmem>>, %arg6: memref<1x32xf32, #tpu.memory_space<vmem>>, %arg7: memref<1x8x32xf32, #tpu.memory_space<vmem>>) attributes {dimension_semantics = [#tpu.dimension_semantics<parallel>, #tpu.dimension_semantics<parallel>], iteration_bounds = array<i64: 2, 1>, scalar_prefetch = 0 : i64, scratch_operands = 0 : i64, tpu.core_type = #tpu.core_type<tc>, window_params = [{transform_indices = @transform_0, window_bounds = array<i64: 1, 8, 32>}, {pipeline_mode = #tpu.pipeline_mode<synchronous>, transform_indices = @transform_1, window_bounds = array<i64: 32, 32>}, {pipeline_mode = #tpu.pipeline_mode<synchronous>, transform_indices = @transform_2, window_bounds = array<i64: 1, 32>}, {pipeline_mode = #tpu.pipeline_mode<synchronous>, transform_indices = @transform_3, window_bounds = array<i64: 1, 32>}, {pipeline_mode = #tpu.pipeline_mode<synchronous>, transform_indices = @transform_4, window_bounds = array<i64: 1, 32>}, {transform_indices = @transform_5, window_bounds = array<i64: 1, 8, 32>}]} {
    %c0 = arith.constant 0 : index
    %c0_0 = arith.constant 0 : index
    %c0_1 = arith.constant 0 : index
    %0 = vector.load %arg2[%c0, %c0_0, %c0_1] : memref<1x8x32xf32, #tpu.memory_space<vmem>>, vector<1x8x32xf32>
    %1 = vector.shape_cast %0 : vector<1x8x32xf32> to vector<8x32xf32>
    %c0_2 = arith.constant 0 : index
    %c0_3 = arith.constant 0 : index
    %2 = vector.load %arg3[%c0_2, %c0_3] : memref<32x32xf32, #tpu.memory_space<vmem>>, vector<32x32xf32>
    %cst = arith.constant dense<0.000000e+00> : vector<8x32xf32>
    %3 = tpu.matmul %1, %2, %cst {dimension_numbers = #tpu.dot_dimension_numbers<[1], [0], [0], [1], [0, 0, 1, 1], [], []>} : vector<8x32xf32>, vector<32x32xf32>, vector<8x32xf32> -> vector<8x32xf32>
    %c0_4 = arith.constant 0 : index
    %c0_5 = arith.constant 0 : index
    %4 = vector.load %arg4[%c0_4, %c0_5] : memref<1x32xf32, #tpu.memory_space<vmem>>, vector<1x32xf32>
    %5 = vector.broadcast %4 : vector<1x32xf32> to vector<8x32xf32>
    %6 = arith.addf %3, %5 : vector<8x32xf32>
    %cst_6 = arith.constant dense<0.000000e+00> : vector<8xf32>
    %7 = vector.multi_reduction <add>, %6, %cst_6 [1] : vector<8x32xf32> to vector<8xf32>
    %8 = vector.shape_cast %7 : vector<8xf32> to vector<8x1xf32>
    %cst_7 = arith.constant 3.200000e+01 : f32
    %9 = vector.broadcast %cst_7 : f32 to vector<8x1xf32>
    %10 = arith.divf %8, %9 : vector<8x1xf32>
    %11 = vector.broadcast %10 : vector<8x1xf32> to vector<8x32xf32>
    %12 = arith.subf %6, %11 : vector<8x32xf32>
    %13 = arith.mulf %12, %12 : vector<8x32xf32>
    %cst_8 = arith.constant dense<0.000000e+00> : vector<8xf32>
    %14 = vector.multi_reduction <add>, %13, %cst_8 [1] : vector<8x32xf32> to vector<8xf32>
    %15 = vector.shape_cast %14 : vector<8xf32> to vector<8x1xf32>
    %cst_9 = arith.constant 3.200000e+01 : f32
    %16 = vector.broadcast %cst_9 : f32 to vector<8x1xf32>
    %17 = arith.divf %15, %16 : vector<8x1xf32>
    %18 = vector.broadcast %10 : vector<8x1xf32> to vector<8x32xf32>
    %19 = arith.subf %6, %18 : vector<8x32xf32>
    %cst_10 = arith.constant 9.99999974E-6 : f32
    %20 = vector.broadcast %cst_10 : f32 to vector<8x1xf32>
    %21 = arith.addf %17, %20 : vector<8x1xf32>
    %22 = math.rsqrt %21 : vector<8x1xf32>
    %23 = vector.broadcast %22 : vector<8x1xf32> to vector<8x32xf32>
    %24 = arith.mulf %19, %23 : vector<8x32xf32>
    %c0_11 = arith.constant 0 : index
    %c0_12 = arith.constant 0 : index
    %25 = vector.load %arg5[%c0_11, %c0_12] : memref<1x32xf32, #tpu.memory_space<vmem>>, vector<1x32xf32>
    %26 = vector.broadcast %25 : vector<1x32xf32> to vector<8x32xf32>
    %27 = arith.mulf %24, %26 : vector<8x32xf32>
    %c0_13 = arith.constant 0 : index
    %c0_14 = arith.constant 0 : index
    %28 = vector.load %arg6[%c0_13, %c0_14] : memref<1x32xf32, #tpu.memory_space<vmem>>, vector<1x32xf32>
    %29 = vector.broadcast %28 : vector<1x32xf32> to vector<8x32xf32>
    %30 = arith.addf %27, %29 : vector<8x32xf32>
    %cst_15 = arith.constant 0.000000e+00 : f32
    %31 = vector.broadcast %cst_15 : f32 to vector<8x32xf32>
    %32 = arith.subf %31, %30 : vector<8x32xf32>
    %33 = math.exp %32 : vector<8x32xf32>
    %cst_16 = arith.constant 1.000000e+00 : f32
    %34 = vector.broadcast %cst_16 : f32 to vector<8x32xf32>
    %35 = arith.addf %34, %33 : vector<8x32xf32>
    %cst_17 = arith.constant 1.000000e+00 : f32
    %36 = vector.broadcast %cst_17 : f32 to vector<8x32xf32>
    %37 = arith.divf %36, %35 : vector<8x32xf32>
    %38 = arith.mulf %30, %37 : vector<8x32xf32>
    %c0_18 = arith.constant 0 : index
    %c0_19 = arith.constant 0 : index
    %c0_20 = arith.constant 0 : index
    %39 = vector.load %arg7[%c0_18, %c0_19, %c0_20] : memref<1x8x32xf32, #tpu.memory_space<vmem>>, vector<1x8x32xf32>
    %40 = vector.shape_cast %39 : vector<1x8x32xf32> to vector<8x32xf32>
    %41 = vector.shape_cast %38 : vector<8x32xf32> to vector<1x8x32xf32>
    tpu.vector_store %arg7[%c0_18, %c0_19, %c0_20], %41 {strides = array<i32>} : memref<1x8x32xf32, #tpu.memory_space<vmem>>, vector<1x8x32xf32>,
    return
  }
  func.func @transform_0(%arg0: i32, %arg1: i32) -> (i32, i32, i32) {
    %c0_i32 = arith.constant 0 : i32
    %c0_i32_0 = arith.constant 0 : i32
    return %arg0, %arg1, %c0_i32 : i32, i32, i32
  }
  func.func @transform_1(%arg0: i32, %arg1: i32) -> (i32, i32) {
    %c0_i32 = arith.constant 0 : i32
    %c0_i32_0 = arith.constant 0 : i32
    %c0_i32_1 = arith.constant 0 : i32
    return %c0_i32, %c0_i32_0 : i32, i32
  }
  func.func @transform_2(%arg0: i32, %arg1: i32) -> (i32, i32) {
    %c0_i32 = arith.constant 0 : i32
    %c0_i32_0 = arith.constant 0 : i32
    %c0_i32_1 = arith.constant 0 : i32
    return %c0_i32, %c0_i32_0 : i32, i32
  }
  func.func @transform_3(%arg0: i32, %arg1: i32) -> (i32, i32) {
    %c0_i32 = arith.constant 0 : i32
    %c0_i32_0 = arith.constant 0 : i32
    %c0_i32_1 = arith.constant 0 : i32
    return %c0_i32, %c0_i32_0 : i32, i32
  }
  func.func @transform_4(%arg0: i32, %arg1: i32) -> (i32, i32) {
    %c0_i32 = arith.constant 0 : i32
    %c0_i32_0 = arith.constant 0 : i32
    %c0_i32_1 = arith.constant 0 : i32
    return %c0_i32, %c0_i32_0 : i32, i32
  }
  func.func @transform_5(%arg0: i32, %arg1: i32) -> (i32, i32, i32) {
    %c0_i32 = arith.constant 0 : i32
    %c0_i32_0 = arith.constant 0 : i32
    return %arg0, %arg1, %c0_i32 : i32, i32, i32
  }
}

</mosaic_0001>

<llo_original>
// kernel: tpu_custom_call.1
$region0: #{tpu_custom_call.1}
  #allocation0 [shape = 'u32[]', space=smem, size = 0x4, offset = 0x4, fixed_abs, tag = 'smem constant byte address 0x4 - core index']
  #allocation1 [shape = 'u32[72,128]{1,0:T(1,128)}', space=vmem, size = 0x9000, scoped, tag = 'internal scratch']
  %s0 = inlined_call_operand.hbm [shape: f32[2,8,32], index: 0, kind: input, shape index: {}]
  %s1 = inlined_call_operand.hbm [shape: f32[32,32], index: 1, kind: input, shape index: {}]
  %s2 = inlined_call_operand.vmem [shape: f32[1,32], index: 2, kind: input, shape index: {}]
  %s3 = inlined_call_operand.vmem [shape: f32[1,32], index: 3, kind: input, shape index: {}]
  %s4 = inlined_call_operand.vmem [shape: f32[1,32], index: 4, kind: input, shape index: {}]
  %s5 = inlined_call_operand.hbm [shape: f32[2,8,32], index: 5, kind: output, shape index: {}]
  %s6 = sld [smem:[#allocation0]]
  $region61: #{tpu_custom_call.1} parent=0
    _
  %s8 = ssub.s32 1, %s6
  %s9 = scalar_select 0, %s8, %s6
  $region1: #{tpu_custom_call.1} parent=0
    #allocation2 [shape = 'u8[8192]{0}', space=vmem, size = 0x2000, scoped, tag = 'input window, operand 0']
    #allocation3 [shape = 's32[2]{0}', space=sflag, size = 0x8, scoped, tag = 'scoped memory for tpu_custom_call.1']
    #allocation4 [shape = 's32[2]{0}', space=sflag, size = 0x8, scoped, tag = 'scoped memory for tpu_custom_call.1']
    #allocation5 [shape = 'u8[16384]{0}', space=vmem, size = 0x4000, scoped, tag = 'input window, operand 1, single buffered']
    #allocation6 [shape = 's32[1]{0}', space=sflag, size = 0x4, scoped, tag = 'scoped memory for tpu_custom_call.1']
    #allocation7 [shape = 'u8[8192]{0}', space=vmem, size = 0x2000, scoped, tag = 'output window, operand 0']
    %10 = vsyncpa [#allocation3], 0
    %s11 = scalar_lea.sflag [#allocation3], 1
    %12 = vsyncpa %s11, 0
    %13 = vsyncpa [#allocation6], 0
    %14 = vsyncpa [#allocation4], 0
    %s15 = scalar_lea.sflag [#allocation4], 1
    %16 = vsyncpa %s15, 0
    loop: start=0, step=1, limit=4
    $region2: #{tpu_custom_call.1} parent=1 // loop_pre_header
      _
    $region3: #{tpu_custom_call.1} parent=1 // loop_header
      %s18 = sphi 0, %s22
      %p19 = scmp.ge.s32.totalorder %s18, 4
      %s25 = sphi 0, %s37
      %s26 = sphi 0, %s33
      %s27 = sphi 0, %s25
      %s28 = sphi 0, %s26
      %s29 = sphi 0, %s27
      %s30 = sphi 0, %s28
      %s42 = sphi 0, %s44
      %s45 = sphi 0, %s42
      %s46 = sphi 0, %s45
      %s62 = sphi 0, %s46
      %s66 = sphi 0, %s66
      %s68 = sphi 0, %s66
      %s69 = sphi 0, %s68
      %s83 = sphi 0, %s69
      %s87 = sphi 0, %s87
      %s89 = sphi 0, %s87
      %s90 = sphi 0, %s89
      %s104 = sphi 0, %s90
      %s108 = sphi 0, %s108
      %s110 = sphi 0, %s108
      %s111 = sphi 0, %s110
      %s125 = sphi 0, %s111
      %s129 = sphi 0, %s129
      %s131 = sphi 0, %s129
      %s132 = sphi 0, %s131
      %s146 = sphi 0, %s132
      %s154 = sphi 0, %s156
      %s157 = sphi 0, %s154
      %s158 = sphi 0, %s157
      %s174 = sphi 0, %s158
    $region4: #{tpu_custom_call.1} parent=1 // loop_header_branch
      %21 = sbr.rel (%p19) target = $region8
    $region5: #{tpu_custom_call.1} parent=1 // loop_body
      %s23 = ssub.s32 %s18, 1
      %s24 = ssub.s32 %s18, 2
      %s31 = sadd.s32 1, %s26
      %p32 = scmp.ge.s32.totalorder %s31, 1
      %s33 = scalar_select %p32, 0, %s31
      %s34 = sadd.s32 1, %s25
      %s35 = scalar_select %p32, %s34, %s25
      %p36 = scmp.ge.s32.totalorder %s35, 2
      %s37 = scalar_select %p36, 0, %s35
      %s38 = ssub.s32 %s25, %s37
      %s39 = ssub.s32 %s26, %s33
      %s40 = sor.u32 %s38, %s39
      %p41 = scmp.eq.s32.totalorder %s40, 0
      %s43 = sadd.s32 %s42, 1
      %s44 = scalar_select %p41, %s42, %s43
      %p47 = pneg %p41
      %p48 = scmp.eq.s32.totalorder %s18, 1
      %p49 = por %p47, %p48
      %p50 = scmp.ne.s32.totalorder %s42, %s45
      %p51 = scmp.eq.s32.totalorder %s18, 0
      %p52 = por %p50, %p51
      %p53 = scmp.ne.s32.totalorder %s42, %s45
      %p54 = scmp.eq.s32.totalorder %s23, 1
      %p55 = por %p53, %p54
      %p56 = scmp.ne.s32.totalorder %s45, %s46
      %p57 = scmp.eq.s32.totalorder %s23, 0
      %p58 = por %p56, %p57
      %p59 = scmp.ne.s32.totalorder %s45, %s46
      %p60 = scmp.eq.s32.totalorder %s24, 1
      %p61 = por %p59, %p60
      %p63 = scmp.ne.s32.totalorder %s46, %s62
      %p64 = scmp.eq.s32.totalorder %s24, 0
      %p65 = por %p63, %p64
      %s67 = sadd.s32 %s66, 1
      %p70 = scmp.eq.s32.totalorder %s18, 1
      %p71 = scmp.ne.s32.totalorder %s66, %s68
      %p72 = scmp.eq.s32.totalorder %s18, 0
      %p73 = por %p71, %p72
      %p74 = scmp.ne.s32.totalorder %s66, %s68
      %p75 = scmp.eq.s32.totalorder %s23, 1
      %p76 = por %p74, %p75
      %p77 = scmp.ne.s32.totalorder %s68, %s69
      %p78 = scmp.eq.s32.totalorder %s23, 0
      %p79 = por %p77, %p78
      %p80 = scmp.ne.s32.totalorder %s68, %s69
      %p81 = scmp.eq.s32.totalorder %s24, 1
      %p82 = por %p80, %p81
      %p84 = scmp.ne.s32.totalorder %s69, %s83
      %p85 = scmp.eq.s32.totalorder %s24, 0
      %p86 = por %p84, %p85
      %s88 = sadd.s32 %s87, 1
      %p91 = scmp.eq.s32.totalorder %s18, 1
      %p92 = scmp.ne.s32.totalorder %s87, %s89
      %p93 = scmp.eq.s32.totalorder %s18, 0
      %p94 = por %p92, %p93
      %p95 = scmp.ne.s32.totalorder %s87, %s89
      %p96 = scmp.eq.s32.totalorder %s23, 1
      %p97 = por %p95, %p96
      %p98 = scmp.ne.s32.totalorder %s89, %s90
      %p99 = scmp.eq.s32.totalorder %s23, 0
      %p100 = por %p98, %p99
      %p101 = scmp.ne.s32.totalorder %s89, %s90
      %p102 = scmp.eq.s32.totalorder %s24, 1
      %p103 = por %p101, %p102
      %p105 = scmp.ne.s32.totalorder %s90, %s104
      %p106 = scmp.eq.s32.totalorder %s24, 0
      %p107 = por %p105, %p106
      %s109 = sadd.s32 %s108, 1
      %p112 = scmp.eq.s32.totalorder %s18, 1
      %p113 = scmp.ne.s32.totalorder %s108, %s110
      %p114 = scmp.eq.s32.totalorder %s18, 0
      %p115 = por %p113, %p114
      %p116 = scmp.ne.s32.totalorder %s108, %s110
      %p117 = scmp.eq.s32.totalorder %s23, 1
      %p118 = por %p116, %p117
      %p119 = scmp.ne.s32.totalorder %s110, %s111
      %p120 = scmp.eq.s32.totalorder %s23, 0
      %p121 = por %p119, %p120
      %p122 = scmp.ne.s32.totalorder %s110, %s111
      %p123 = scmp.eq.s32.totalorder %s24, 1
      %p124 = por %p122, %p123
      %p126 = scmp.ne.s32.totalorder %s111, %s125
      %p127 = scmp.eq.s32.totalorder %s24, 0
      %p128 = por %p126, %p127
      %s130 = sadd.s32 %s129, 1
      %p133 = scmp.eq.s32.totalorder %s18, 1
      %p134 = scmp.ne.s32.totalorder %s129, %s131
      %p135 = scmp.eq.s32.totalorder %s18, 0
      %p136 = por %p134, %p135
      %p137 = scmp.ne.s32.totalorder %s129, %s131
      %p138 = scmp.eq.s32.totalorder %s23, 1
      %p139 = por %p137, %p138
      %p140 = scmp.ne.s32.totalorder %s131, %s132
      %p141 = scmp.eq.s32.totalorder %s23, 0
      %p142 = por %p140, %p141
      %p143 = scmp.ne.s32.totalorder %s131, %s132
      %p144 = scmp.eq.s32.totalorder %s24, 1
      %p145 = por %p143, %p144
      %p147 = scmp.ne.s32.totalorder %s132, %s146
      %p148 = scmp.eq.s32.totalorder %s24, 0
      %p149 = por %p147, %p148
      %s150 = ssub.s32 %s25, %s37
      %s151 = ssub.s32 %s26, %s33
      %s152 = sor.u32 %s150, %s151
      %p153 = scmp.eq.s32.totalorder %s152, 0
      %s155 = sadd.s32 %s154, 1
      %s156 = scalar_select %p153, %s154, %s155
      %p159 = pneg %p153
      %p160 = scmp.eq.s32.totalorder %s18, 1
      %p161 = por %p159, %p160
      %p162 = scmp.ne.s32.totalorder %s154, %s157
      %p163 = scmp.eq.s32.totalorder %s18, 0
      %p164 = por %p162, %p163
      %p165 = scmp.ne.s32.totalorder %s154, %s157
      %p166 = scmp.eq.s32.totalorder %s23, 1
      %p167 = por %p165, %p166
      %p168 = scmp.ne.s32.totalorder %s157, %s158
      %p169 = scmp.eq.s32.totalorder %s23, 0
      %p170 = por %p168, %p169
      %p171 = scmp.ne.s32.totalorder %s157, %s158
      %p172 = scmp.eq.s32.totalorder %s24, 1
      %p173 = por %p171, %p172
      %p175 = scmp.ne.s32.totalorder %s158, %s174
      %p176 = scmp.eq.s32.totalorder %s24, 0
      %p177 = por %p175, %p176
      %p178 = scmp.le.s32.totalorder 1, %s18
      %p179 = scmp.lt.s32.totalorder %s18, 3
      %p180 = pnand %p178, %p179
      %p181 = pneg %p180
      // Predicated region
      $region9: #{tpu_custom_call.1} parent=5 // pred_check
        _
      $region10: #{tpu_custom_call.1} parent=5 // pred_check_branch
        %183 = sbr.rel (%p180) target = $region12
      $region11: #{tpu_custom_call.1} parent=5 // pred_region
        %s184 = ssub.s32 %s18, 1
        // Predicated region
        $region13: #{tpu_custom_call.1} parent=11 // pred_check
          %p185 = pneg %p79
        $region14: #{tpu_custom_call.1} parent=11 // pred_check_branch
          %187 = sbr.rel (%p185) target = $region16
        $region15: #{tpu_custom_call.1} parent=11 // pred_region
          %189 = vsyncadd [#allocation6], 0
          %s190 = sshll.u32 %s1, 4
          %s191 = int_to_ptr.hbm [resolvable:$true] %s190
          %s192 = sshll.u32 [#allocation5], 4
          %s193 = int_to_ptr.vmem [resolvable:$true] %s192
          %198 = dma.hbm_to_vmem [thread:$0]  %s191, 512, %s193, [#allocation6], 128, 128, 8
        $region16: #{tpu_custom_call.1} parent=11 // pred_fallthru
          _
        // Predicated region
        $region17: #{tpu_custom_call.1} parent=11 // pred_check
          %p199 = pneg %p100
        $region18: #{tpu_custom_call.1} parent=11 // pred_check_branch
          %201 = sbr.rel (%p199) target = $region20
        $region19: #{tpu_custom_call.1} parent=11 // pred_region
          _
        $region20: #{tpu_custom_call.1} parent=11 // pred_fallthru
          _
        // Predicated region
        $region21: #{tpu_custom_call.1} parent=11 // pred_check
          %p202 = pneg %p121
        $region22: #{tpu_custom_call.1} parent=11 // pred_check_branch
          %204 = sbr.rel (%p202) target = $region24
        $region23: #{tpu_custom_call.1} parent=11 // pred_region
          _
        $region24: #{tpu_custom_call.1} parent=11 // pred_fallthru
          _
        // Predicated region
        $region25: #{tpu_custom_call.1} parent=11 // pred_check
          %p205 = pneg %p142
        $region26: #{tpu_custom_call.1} parent=11 // pred_check_branch
          %207 = sbr.rel (%p205) target = $region28
        $region27: #{tpu_custom_call.1} parent=11 // pred_region
          _
        $region28: #{tpu_custom_call.1} parent=11 // pred_fallthru
          _
      $region12: #{tpu_custom_call.1} parent=5 // pred_fallthru
        _
      %p208 = scmp.lt.s32.totalorder %s18, 2
      // Predicated region
      $region29: #{tpu_custom_call.1} parent=5 // pred_check
        %p209 = pneg %p208
      $region30: #{tpu_custom_call.1} parent=5 // pred_check_branch
        %211 = sbr.rel (%p209) target = $region32
      $region31: #{tpu_custom_call.1} parent=5 // pred_region
        // Predicated region
        $region33: #{tpu_custom_call.1} parent=31 // pred_check
          %p212 = pneg %p52
        $region34: #{tpu_custom_call.1} parent=31 // pred_check_branch
          %214 = sbr.rel (%p212) target = $region36
        $region35: #{tpu_custom_call.1} parent=31 // pred_region
          %s215 = sand.u32 %s42, 1
          %s216 = scalar_lea.sflag [#allocation3], %s215
          %s217 = sand.u32 %s42, 1
          %s218 = smul.addr %s217, 8
          %s219 = scalar_lea.vmem [#allocation2], %s218
          %221 = vsyncadd %s216, 0
          %s222 = sadd.s32 %s26, %s25
          %s223 = smul.addr %s222, 8
          %s224 = scalar_lea.hbm %s0, %s223
          %s226 = sshll.u32 %s224, 4
          %s227 = int_to_ptr.hbm [resolvable:$true] %s226
          %s228 = sshll.u32 %s219, 4
          %s229 = int_to_ptr.vmem [resolvable:$true] %s228
          %231 = dma.hbm_to_vmem [thread:$0]  %s227, 128, %s229, %s216
        $region36: #{tpu_custom_call.1} parent=31 // pred_fallthru
          _
      $region32: #{tpu_custom_call.1} parent=5 // pred_fallthru
        _
      %p232 = scmp.le.s32.totalorder 1, %s18
      %p233 = scmp.lt.s32.totalorder %s18, 3
      %p234 = pnand %p232, %p233
      %p235 = pneg %p234
      // Predicated region
      $region37: #{tpu_custom_call.1} parent=5 // pred_check
        _
      $region38: #{tpu_custom_call.1} parent=5 // pred_check_branch
        %237 = sbr.rel (%p234) target = $region40
      $region39: #{tpu_custom_call.1} parent=5 // pred_region
        %s238 = ssub.s32 %s18, 1
        %s239 = sand.u32 %s45, 1
        %s240 = scalar_lea.sflag [#allocation3], %s239
        %s241 = sand.u32 %s45, 1
        %s242 = smul.addr %s241, 8
        %s243 = scalar_lea.vmem [#allocation2], %s242
        // Predicated region
        $region41: #{tpu_custom_call.1} parent=39 // pred_check
          %p244 = pneg %p58
        $region42: #{tpu_custom_call.1} parent=39 // pred_check_branch
          %246 = sbr.rel (%p244) target = $region44
        $region43: #{tpu_custom_call.1} parent=39 // pred_region
          %248 = dma.done %s240, 128
        $region44: #{tpu_custom_call.1} parent=39 // pred_fallthru
          _
        // Predicated region
        $region45: #{tpu_custom_call.1} parent=39 // pred_check
          %p249 = pneg %p79
        $region46: #{tpu_custom_call.1} parent=39 // pred_check_branch
          %251 = sbr.rel (%p249) target = $region48
        $region47: #{tpu_custom_call.1} parent=39 // pred_region
          %253 = dma.done [#allocation6], 512
        $region48: #{tpu_custom_call.1} parent=39 // pred_fallthru
          _
        %s254 = sand.u32 %s45, 1
        %s255 = scalar_lea.sflag [#allocation3], %s254
        %s256 = sand.u32 %s45, 1
        %s257 = smul.addr %s256, 8
        %s258 = scalar_lea.vmem [#allocation2], %s257
        %p259 = pneg %p58
        %p260 = pneg %p55
        %p261 = pneg %p79
        %p262 = pneg %p76
        %p263 = pneg %p100
        %p264 = pneg %p97
        %p265 = pneg %p121
        %p266 = pneg %p118
        %p267 = pneg %p142
        %p268 = pneg %p139
        %p269 = pneg %p170
        %p270 = pneg %p167
        %s271 = sand.u32 %s157, 1
        %s272 = scalar_lea.sflag [#allocation4], %s271
        %s273 = sand.u32 %s157, 1
        %s274 = smul.addr %s273, 8
        %s275 = scalar_lea.vmem [#allocation7], %s274
        %v276 = vld [vmem:[%s243] sm:$0xff]
        %v277 = vld [vmem:[#allocation5] sm:$0xff]
        %v278 = vld [vmem:[#allocation5 + $0x8] sm:$0xff]
        %v279 = vld [vmem:[#allocation5 + $0x10] sm:$0xff]
        %v280 = vld [vmem:[#allocation5 + $0x18] sm:$0xff]
        %v281 = vld [vmem:[%s2] sm:$0x1]
        %v283 = vperm.slane %v281, 0
        %vm285 = vcmask 261120
        %v287 = vsel %vm285, %v276, 0
        %289 = vmatpush.msra.mxu0 0.0
        %290 = vmatpush.msra.mxu0 0.0
        %291 = vmatpush.msra.mxu0 0.0
        %292 = vmatpush.msra.mxu0 0.0
        %293 = vmatpush.msra.mxu0 0.0
        %294 = vmatpush.msra.mxu0 0.0
        %295 = vmatpush.msra.mxu0 0.0
        %296 = vmatpush.msra.mxu0 0.0
        %297 = vmatpush.msra.mxu0 0.0
        %298 = vmatpush.msra.mxu0 0.0
        %299 = vmatpush.msra.mxu0 0.0
        %300 = vmatpush.msra.mxu0 0.0
        %301 = vmatpush.msra.mxu0 %v280
        %302 = vmatpush.msra.mxu0 %v279
        %303 = vmatpush.msra.mxu0 %v278
        %304 = vmatpush.msra.mxu0 %v277
        %305 = vmatmul.f32.gmra.mxu0 %v287
        %v306 = vpop.f32.mrf.mxu0
        %v307 = vadd.f32 %v283, %v306
        %308 = vdwg.mxu0
        %v309 = vsel %vm285, %v307, 0.0
        %310 = vadd.xlane.f32.xlu0 %v309
        %v311 = vpop.xlane.xlu0 %310
        %v312 = vrcp.pop 32.0
        %v313 = vmul.f32 32.0, %v312
        %v314 = vsub.f32 1.0, %v313
        %v315 = vmul.f32 %v312, %v314
        %v316 = vadd.f32 %v312, %v315
        %vm317 = vweird.f32 %v312
        %v318 = vsel %vm317, %v312, %v316
        %v319 = vmul.f32 %v311, %v318
        %v320 = vsub.f32 %v307, %v319
        %v321 = vmul.f32 %v320, %v320
        %v322 = vsel %vm285, %v321, 0.0
        %323 = vadd.xlane.f32.xlu0 %v322
        %v324 = vpop.xlane.xlu0 %323
        %v325 = vmul.f32 %v324, %v318
        %v326 = vadd.f32 %v325, 1e-05
        %v327 = vrsqrt.pop %v326
        %v328 = vmul.f32 %v327, %v326
        %v329 = vmul.f32 %v328, %v327
        %v330 = vmul.f32 0.5, %v329
        %v331 = vsub.f32 1.5, %v330
        %v332 = vmul.f32 %v327, %v331
        %vm333 = vweird.f32 %v326
        %vm334 = vweird.f32 %v327
        %vm335 = vmor %vm333, %vm334
        %v336 = vsel %vm335, %v327, %v332
        %v337 = vmul.f32 %v320, %v336
        %v338 = vld [vmem:[%s3] sm:$0x1]
        %v340 = vperm.slane %v338, 0
        %v342 = vmul.f32 %v337, %v340
        %v343 = vld [vmem:[%s4] sm:$0x1]
        %v345 = vperm.slane %v343, 0
        %v347 = vadd.f32 %v342, %v345
        %v348 = vsub.f32 0.0, %v347
        %v349 = vmul.f32 %v348, 1.442695
        %v350 = vpow.pop %v349
        %v351 = vadd.f32 %v350, 1.0
        %v352 = vrcp.pop %v351
        %v353 = vmul.f32 %v351, %v352
        %v354 = vsub.f32 1.0, %v353
        %v355 = vmul.f32 %v352, %v354
        %v356 = vadd.f32 %v352, %v355
        %vm357 = vweird.f32 %v351
        %vm358 = vweird.f32 %v352
        %vm359 = vmor %vm357, %vm358
        %v360 = vsel %vm359, %v352, %v356
        %v361 = vand.u32 2147483647, %v351
        %vm362 = vcmp.eq.f32.partialorder %v361, 8.507059e+37
        %v363 = vand.u32 %v351, 2147483648
        %v364 = vor.u32 1.1754944e-38, %v363
        %v365 = vsel %vm362, %v364, %v360
        %v366 = vmul.f32 1.0, %v365
        %v367 = vmul.f32 %v347, %v366
        %368 = vst.msk [vmem:[%s275] sm:$0xff] %vm285, %v367
        %s369 = sand.u32 %s157, 1
        %s370 = scalar_lea.sflag [#allocation4], %s369
        %s371 = sand.u32 %s157, 1
        %s372 = smul.addr %s371, 8
        %s373 = scalar_lea.vmem [#allocation7], %s372
        // Predicated region
        $region49: #{tpu_custom_call.1} parent=39 // pred_check
          %p374 = pneg %p167
        $region50: #{tpu_custom_call.1} parent=39 // pred_check_branch
          %376 = sbr.rel (%p374) target = $region52
        $region51: #{tpu_custom_call.1} parent=39 // pred_region
          %378 = vsyncadd %s370, 0
          %s379 = sadd.s32 %s28, %s27
          %s380 = smul.addr %s379, 8
          %s381 = scalar_lea.hbm %s5, %s380
          %s383 = sshll.u32 %s373, 4
          %s384 = int_to_ptr.vmem [resolvable:$true] %s383
          %s385 = sshll.u32 %s381, 4
          %s386 = int_to_ptr.hbm [resolvable:$true] %s385
          %388 = dma.vmem_to_hbm [thread:$0]  %s384, 128, %s386, %s370
        $region52: #{tpu_custom_call.1} parent=39 // pred_fallthru
          _
      $region40: #{tpu_custom_call.1} parent=5 // pred_fallthru
        _
      %p389 = scmp.le.s32.totalorder 2, %s18
      // Predicated region
      $region53: #{tpu_custom_call.1} parent=5 // pred_check
        %p390 = pneg %p389
      $region54: #{tpu_custom_call.1} parent=5 // pred_check_branch
        %392 = sbr.rel (%p390) target = $region56
      $region55: #{tpu_custom_call.1} parent=5 // pred_region
        %s393 = ssub.s32 %s18, 2
        // Predicated region
        $region57: #{tpu_custom_call.1} parent=55 // pred_check
          %p394 = pneg %p173
        $region58: #{tpu_custom_call.1} parent=55 // pred_check_branch
          %396 = sbr.rel (%p394) target = $region60
        $region59: #{tpu_custom_call.1} parent=55 // pred_region
          %s397 = sand.u32 %s158, 1
          %s398 = scalar_lea.sflag [#allocation4], %s397
          %s399 = sand.u32 %s158, 1
          %s400 = smul.addr %s399, 8
          %s401 = scalar_lea.vmem [#allocation7], %s400
          %403 = dma.done %s398, 128
        $region60: #{tpu_custom_call.1} parent=55 // pred_fallthru
          _
      $region56: #{tpu_custom_call.1} parent=5 // pred_fallthru
        _
    $region6: #{tpu_custom_call.1} parent=1 // loop_footer
      %s22 = sadd.s32 1, %s18
    $region7: #{tpu_custom_call.1} parent=1 // loop_footer_branch
      %17 = sbr.rel target = $region3
    $region8: #{tpu_custom_call.1} parent=1 // loop_exit
      _
    %404 = vsyncpa [#allocation3], 1
    %s405 = scalar_lea.sflag [#allocation3], 1
    %406 = vsyncpa %s405, 1
    %407 = vsyncpa [#allocation6], 1
    %408 = vsyncpa [#allocation4], 1
    %s409 = scalar_lea.sflag [#allocation4], 1
    %410 = vsyncpa %s409, 1

</llo_original>
